<compile_context>
chip_gen: v5e
topology: v5e:2x2
jax: 0.10.0
libtpu: 0.0.40
codegen_flags: <defaults>
</compile_context>

<pallas_src>
import jax
import jax.numpy as jnp
from jax.experimental import pallas as pl
from jax.experimental.pallas import tpu as pltpu

BN_EPS = 1e-5
LANE = 128
SUBLANE = 8
TK_MAX = 512  # largest single K tile before we switch to a tiled reduction


def _round_up(n, m):
    return ((n + m - 1) // m) * m


def _make_kernel(D, C_pad, B_real):
    inv_n = 1.0 / float(B_real)

    def kernel(x_ref, w1_ref, w2_ref, p_ref, feat_ref, logits_ref, h_acc):
        k = pl.program_id(0)

        @pl.when(k == 0)
        def _init():
            h_acc[...] = jnp.zeros_like(h_acc)

        # Bottleneck linear: bf16 x bf16 -> f32 on the MXU, accumulated over
        # the K (feature-dim) grid axis.  Bias b1 omitted: it cancels exactly
        # under training-mode (batch-statistics) BatchNorm.
        h_acc[...] += jnp.dot(x_ref[...], w1_ref[...],
                              preferred_element_type=jnp.float32)

        @pl.when(k == pl.num_programs(0) - 1)
        def _finish():
            h = h_acc[...]                                    # [B_pad, D] f32

            # BatchNorm1d training-mode stats over the *real* batch rows.
            # Padded x rows are zero -> h == 0 there, so sum(h) and sum(h*h)
            # already exclude them; E[h^2] - mean^2 needs no row mask.
            mean = jnp.sum(h, axis=0, keepdims=True) * inv_n
            ex2 = jnp.sum(h * h, axis=0, keepdims=True) * inv_n
            var = ex2 - mean * mean

            p = p_ref[...]                  # [3, P] packed small params (one DMA)
            gamma = p[0:1, :D]
            beta = p[1:2, :D]
            b2 = p[2:3, :C_pad]

            # Fold BN into a single per-column scale/shift -> one FMA over [B, D];
            # rsqrt goes to the EUP slot.  All BN math stays f32.
            scale = gamma * jax.lax.rsqrt(var + BN_EPS)
            shift = beta - mean * scale
            h_bn = h * scale + shift

            feat_ref[...] = h_bn.astype(feat_ref.dtype)

            # Classifier linear: bf16 operands against the lane-padded [D, C_pad]
            # weight, f32 accumulation, dense unmasked 128-lane store.
            y = jnp.dot(h_bn.astype(w2_ref.dtype), w2_ref[...],
                        preferred_element_type=jnp.float32) + b2
            logits_ref[...] = y.astype(logits_ref.dtype)

    return kernel


def prepare_params(w1, b1, gamma, beta, w2, b2):
    """One-time (outside the hot path) repack of PyTorch-layout parameters.

    w1: [D, F], b1: [D] (unused: cancels under training-mode BatchNorm),
    gamma/beta: [D], w2: [C, D], b2: [C].
    """
    del b1  # exactly cancels in (h - mean); only matters for eval-mode running stats
    D, F = w1.shape
    C = w2.shape[0]
    C_pad = _round_up(C, LANE)
    P = max(D, C_pad)

    if F <= TK_MAX:
        F_pad, TK = F, F                       # single K step, no column padding
    else:
        F_pad = _round_up(F, LANE)
        TK = 512 if F_pad % 512 == 0 else (256 if F_pad % 256 == 0 else 128)

    w1_t = jnp.zeros((F_pad, D), jnp.bfloat16).at[:F, :].set(
        jnp.transpose(w1).astype(jnp.bfloat16))                     # [F_pad, D] bf16
    w2_t = jnp.zeros((D, C_pad), jnp.bfloat16).at[:, :C].set(
        jnp.transpose(w2).astype(jnp.bfloat16))                     # [D, C_pad] bf16

    packed = jnp.zeros((3, P), jnp.float32)
    packed = packed.at[0, :D].set(gamma.astype(jnp.float32))
    packed = packed.at[1, :D].set(beta.astype(jnp.float32))
    packed = packed.at[2, :C].set(b2.astype(jnp.float32))

    return dict(w1_t=w1_t, w2_t=w2_t, packed=packed,
                C=C, F=F, F_pad=F_pad, TK=TK)


def res_classifier_forward(x, prepared, *, slice_outputs=True,
                           feat_dtype=jnp.float32):
    """x: [B, F].  Returns (feat [B, D], logits [B, C]).

    With slice_outputs=False the lane/sublane-padded buffers are returned
    directly (no extra HBM copies); padded logit columns are exactly 0.0 and
    must be masked before softmax/argmax.
    """
    w1_t, w2_t, packed = prepared["w1_t"], prepared["w2_t"], prepared["packed"]
    C, F, F_pad, TK = prepared["C"], prepared["F"], prepared["F_pad"], prepared["TK"]
    B = x.shape[0]
    D = w1_t.shape[1]
    C_pad = w2_t.shape[1]
    P = packed.shape[1]

    x = x.astype(jnp.bfloat16)
    B_pad = _round_up(B, SUBLANE)
    if B_pad != B or F_pad != F:
        # TODO(synk): avoid this HBM copy by having callers supply B % 8 == 0
        # (and lane-aligned F when F > 512).
        x = jnp.zeros((B_pad, F_pad), jnp.bfloat16).at[:B, :F].set(x)

    n_k = F_pad // TK

    # Explicit VMEM budget (double-buffered bf16 inputs + f32 outputs/scratch),
    # capped so the same config stays well inside v7x's 64 MiB VMEM.
    est = (2 * (B_pad * TK + TK * D) * 2          # x, w1 tiles (bf16, 2 buffers)
           + 2 * (D * C_pad * 2 + 3 * P * 4)      # w2, packed params
           + B_pad * D * 4 + B_pad * C_pad * 4    # outputs
           + B_pad * D * 4)                       # f32 accumulator scratch
    vmem_limit = int(min(48 * 2**20, max(4 * 2**20, 2 * est)))

    # TODO(synk): for very large B, add a two-phase B tiling (pass 1 reduces
    # per-column sum / sum-of-squares, pass 2 applies folded BN + classifier)
    # so the batch axis can be tiled/"parallel" despite the batch-stat BN.
    feat, logits = pl.pallas_call(
        _make_kernel(D, C_pad, B),
        out_shape=(
            jax.ShapeDtypeStruct((B_pad, D), feat_dtype),
            jax.ShapeDtypeStruct((B_pad, C_pad), jnp.float32),
        ),
        grid=(n_k,),
        in_specs=[
            pl.BlockSpec((B_pad, TK), lambda k: (0, k)),
            pl.BlockSpec((TK, D), lambda k: (k, 0)),
            pl.BlockSpec((D, C_pad), lambda k: (0, 0)),
            pl.BlockSpec((3, P), lambda k: (0, 0)),
        ],
        out_specs=(
            pl.BlockSpec((B_pad, D), lambda k: (0, 0)),
            pl.BlockSpec((B_pad, C_pad), lambda k: (0, 0)),
        ),
        scratch_shapes=[pltpu.VMEM((B_pad, D), jnp.float32)],
        compiler_params=pltpu.CompilerParams(
            dimension_semantics=("arbitrary",),
            vmem_limit_bytes=vmem_limit,
        ),
    )(x, w1_t, w2_t, packed)

    if slice_outputs:
        return feat[:B], logits[:B, :C]
    return feat, logits


def init_params(key, class_num, feature_dim, bottleneck_dim):
    """Deterministic init mimicking init_weights / BatchNorm defaults."""
    k1, k2, k3 = jax.random.split(key, 3)
    std1 = (2.0 / (feature_dim + bottleneck_dim)) ** 0.5
    w1 = std1 * jax.random.normal(k1, (bottleneck_dim, feature_dim), jnp.float32)
    b1 = jnp.zeros((bottleneck_dim,), jnp.float32)
    std2 = (2.0 / (bottleneck_dim + class_num)) ** 0.5
    w2 = std2 * jax.random.normal(k2, (class_num, bottleneck_dim), jnp.float32)
    b2 = jnp.zeros((class_num,), jnp.float32)
    gamma = 1.0 + 0.02 * jax.random.normal(k3, (bottleneck_dim,), jnp.float32)
    beta = jnp.zeros((bottleneck_dim,), jnp.float32)
    return w1, b1, gamma, beta, w2, b2


if __name__ == "__main__":
    key = jax.random.PRNGKey(0)
    kx, kp = jax.random.split(key)

    B = 8
    feature_dim = 32
    bottleneck_dim = 256
    class_num = 10

    x = jax.random.normal(kx, (B, feature_dim), jnp.float32)
    params = init_params(kp, class_num, feature_dim, bottleneck_dim)
    prepared = prepare_params(*params)   # one-time repack, outside the hot path

    feat, logits = res_classifier_forward(x, prepared)
    jax.block_until_ready((feat, logits))

    # Reference in plain JAX, mirroring the kernel's bf16 matmul operands
    # (bf16 x bf16 products are exact in f32, so only accumulation order and
    # the variance formula differ).
    w1, b1, gamma, beta, w2, b2 = params
    bfr = lambda a: a.astype(jnp.bfloat16).astype(jnp.float32)
    h = bfr(x) @ bfr(w1).T + b1
    mean = h.mean(0, keepdims=True)
    var = ((h - mean) ** 2).mean(0, keepdims=True)
    h_bn = (h - mean) / jnp.sqrt(var + BN_EPS) * gamma + beta
    y_ref = bfr(h_bn) @ bfr(w2).T + b2

    assert feat.shape == (B, bottleneck_dim) and logits.shape == (B, class_num)
    assert jnp.allclose(feat, h_bn, atol=5e-3, rtol=5e-3), \
        float(jnp.abs(feat - h_bn).max())
    assert jnp.allclose(logits, y_ref, atol=5e-3, rtol=5e-3), \
        float(jnp.abs(logits - y_ref).max())

    print("KERNEL_OK")
</pallas_src>

<mosaic_0001>
module attributes {stable_mosaic.version = 11 : i64} {
  func.func @kernel(%arg0: i32, %arg1: memref<8x32xbf16, #tpu.memory_space<vmem>>, %arg2: memref<32x256xbf16, #tpu.memory_space<vmem>>, %arg3: memref<256x128xbf16, #tpu.memory_space<vmem>>, %arg4: memref<3x256xf32, #tpu.memory_space<vmem>>, %arg5: memref<8x256xf32, #tpu.memory_space<vmem>>, %arg6: memref<8x128xf32, #tpu.memory_space<vmem>>, %arg7: memref<8x256xf32, #tpu.memory_space<vmem>>) attributes {dimension_semantics = [#tpu.dimension_semantics<arbitrary>], iteration_bounds = array<i64: 1>, scalar_prefetch = 0 : i64, scratch_operands = 1 : i64, tpu.core_type = #tpu.core_type<tc>, window_params = [{transform_indices = @transform_0, window_bounds = array<i64: 8, 32>}, {transform_indices = @transform_1, window_bounds = array<i64: 32, 256>}, {pipeline_mode = #tpu.pipeline_mode<synchronous>, transform_indices = @transform_2, window_bounds = array<i64: 256, 128>}, {pipeline_mode = #tpu.pipeline_mode<synchronous>, transform_indices = @transform_3, window_bounds = array<i64: 3, 256>}, {pipeline_mode = #tpu.pipeline_mode<synchronous>, transform_indices = @transform_4, window_bounds = array<i64: 8, 256>}, {pipeline_mode = #tpu.pipeline_mode<synchronous>, transform_indices = @transform_5, window_bounds = array<i64: 8, 128>}]} {
    %c0_i32 = arith.constant 0 : i32
    %0 = arith.cmpi eq, %arg0, %c0_i32 : i32
    %1 = arith.extui %0 : i1 to i32
    %c0_i32_0 = arith.constant 0 : i32
    %2 = arith.cmpi ne, %1, %c0_i32_0 : i32
    scf.if %2 {
      %cst_10 = arith.constant 0.000000e+00 : f32
      %12 = vector.broadcast %cst_10 : f32 to vector<8x256xf32>
      %c0_11 = arith.constant 0 : index
      %c0_12 = arith.constant 0 : index
      %13 = vector.load %arg7[%c0_11, %c0_12] : memref<8x256xf32, #tpu.memory_space<vmem>>, vector<8x256xf32>
      tpu.vector_store %arg7[%c0_11, %c0_12], %12 {strides = array<i32>} : memref<8x256xf32, #tpu.memory_space<vmem>>, vector<8x256xf32>,
    } else {
    }
    %c0 = arith.constant 0 : index
    %c0_1 = arith.constant 0 : index
    %3 = vector.load %arg7[%c0, %c0_1] : memref<8x256xf32, #tpu.memory_space<vmem>>, vector<8x256xf32>
    %c0_2 = arith.constant 0 : index
    %c0_3 = arith.constant 0 : index
    %4 = vector.load %arg1[%c0_2, %c0_3] : memref<8x32xbf16, #tpu.memory_space<vmem>>, vector<8x32xbf16>
    %c0_4 = arith.constant 0 : index
    %c0_5 = arith.constant 0 : index
    %5 = vector.load %arg2[%c0_4, %c0_5] : memref<32x256xbf16, #tpu.memory_space<vmem>>, vector<32x256xbf16>
    %cst = arith.constant dense<0.000000e+00> : vector<8x256xf32>
    %6 = tpu.matmul %4, %5, %cst {dimension_numbers = #tpu.dot_dimension_numbers<[1], [0], [0], [1], [0, 0, 1, 1], [], []>} : vector<8x32xbf16>, vector<32x256xbf16>, vector<8x256xf32> -> vector<8x256xf32>
    %7 = arith.addf %3, %6 : vector<8x256xf32>
    %c0_6 = arith.constant 0 : index
    %c0_7 = arith.constant 0 : index
    %8 = vector.load %arg7[%c0_6, %c0_7] : memref<8x256xf32, #tpu.memory_space<vmem>>, vector<8x256xf32>
    tpu.vector_store %arg7[%c0_6, %c0_7], %7 {strides = array<i32>} : memref<8x256xf32, #tpu.memory_space<vmem>>, vector<8x256xf32>,
    %c0_i32_8 = arith.constant 0 : i32
    %9 = arith.cmpi eq, %arg0, %c0_i32_8 : i32
    %10 = arith.extui %9 : i1 to i32
    %c0_i32_9 = arith.constant 0 : i32
    %11 = arith.cmpi ne, %10, %c0_i32_9 : i32
    scf.if %11 {
      %c0_10 = arith.constant 0 : index
      %c0_11 = arith.constant 0 : index
      %12 = vector.load %arg7[%c0_10, %c0_11] : memref<8x256xf32, #tpu.memory_space<vmem>>, vector<8x256xf32>
      %cst_12 = arith.constant dense<0.000000e+00> : vector<256xf32>
      %13 = vector.multi_reduction <add>, %12, %cst_12 [0] : vector<8x256xf32> to vector<256xf32>
      %14 = vector.shape_cast %13 : vector<256xf32> to vector<1x256xf32>
      %cst_13 = arith.constant 1.250000e-01 : f32
      %15 = vector.broadcast %cst_13 : f32 to vector<1x256xf32>
      %16 = arith.mulf %14, %15 : vector<1x256xf32>
      %17 = arith.mulf %12, %12 : vector<8x256xf32>
      %cst_14 = arith.constant dense<0.000000e+00> : vector<256xf32>
      %18 = vector.multi_reduction <add>, %17, %cst_14 [0] : vector<8x256xf32> to vector<256xf32>
      %19 = vector.shape_cast %18 : vector<256xf32> to vector<1x256xf32>
      %cst_15 = arith.constant 1.250000e-01 : f32
      %20 = vector.broadcast %cst_15 : f32 to vector<1x256xf32>
      %21 = arith.mulf %19, %20 : vector<1x256xf32>
      %22 = arith.mulf %16, %16 : vector<1x256xf32>
      %23 = arith.subf %21, %22 : vector<1x256xf32>
      %c0_16 = arith.constant 0 : index
      %c0_17 = arith.constant 0 : index
      %24 = vector.load %arg4[%c0_16, %c0_17] : memref<3x256xf32, #tpu.memory_space<vmem>>, vector<3x256xf32>
      %25 = vector.extract_strided_slice %24 {offsets = [0, 0], sizes = [1, 256], strides = [1, 1]} : vector<3x256xf32> to vector<1x256xf32>
      %26 = vector.extract_strided_slice %24 {offsets = [1, 0], sizes = [1, 256], strides = [1, 1]} : vector<3x256xf32> to vector<1x256xf32>
      %27 = vector.extract_strided_slice %24 {offsets = [2, 0], sizes = [1, 128], strides = [1, 1]} : vector<3x256xf32> to vector<1x128xf32>
      %cst_18 = arith.constant 9.99999974E-6 : f32
      %28 = vector.broadcast %cst_18 : f32 to vector<1x256xf32>
      %29 = arith.addf %23, %28 : vector<1x256xf32>
      %30 = math.rsqrt %29 : vector<1x256xf32>
      %31 = arith.mulf %25, %30 : vector<1x256xf32>
      %32 = arith.mulf %16, %31 : vector<1x256xf32>
      %33 = arith.subf %26, %32 : vector<1x256xf32>
      %34 = vector.broadcast %31 : vector<1x256xf32> to vector<8x256xf32>
      %35 = arith.mulf %12, %34 : vector<8x256xf32>
      %36 = vector.broadcast %33 : vector<1x256xf32> to vector<8x256xf32>
      %37 = arith.addf %35, %36 : vector<8x256xf32>
      %c0_19 = arith.constant 0 : index
      %c0_20 = arith.constant 0 : index
      %38 = vector.load %arg5[%c0_19, %c0_20] : memref<8x256xf32, #tpu.memory_space<vmem>>, vector<8x256xf32>
      tpu.vector_store %arg5[%c0_19, %c0_20], %37 {strides = array<i32>} : memref<8x256xf32, #tpu.memory_space<vmem>>, vector<8x256xf32>,
      %39 = arith.truncf %37 : vector<8x256xf32> to vector<8x256xbf16>
      %c0_21 = arith.constant 0 : index
      %c0_22 = arith.constant 0 : index
      %40 = vector.load %arg3[%c0_21, %c0_22] : memref<256x128xbf16, #tpu.memory_space<vmem>>, vector<256x128xbf16>
      %cst_23 = arith.constant dense<0.000000e+00> : vector<8x128xf32>
      %41 = tpu.matmul %39, %40, %cst_23 {dimension_numbers = #tpu.dot_dimension_numbers<[1], [0], [0], [1], [0, 0, 1, 1], [], []>} : vector<8x256xbf16>, vector<256x128xbf16>, vector<8x128xf32> -> vector<8x128xf32>
      %42 = vector.broadcast %27 : vector<1x128xf32> to vector<8x128xf32>
      %43 = arith.addf %41, %42 : vector<8x128xf32>
      %c0_24 = arith.constant 0 : index
      %c0_25 = arith.constant 0 : index
      %44 = vector.load %arg6[%c0_24, %c0_25] : memref<8x128xf32, #tpu.memory_space<vmem>>, vector<8x128xf32>
      tpu.vector_store %arg6[%c0_24, %c0_25], %43 {strides = array<i32>} : memref<8x128xf32, #tpu.memory_space<vmem>>, vector<8x128xf32>,
    } else {
    }
    return
  }
  func.func @transform_0(%arg0: i32) -> (i32, i32) {
    %c0_i32 = arith.constant 0 : i32
    %c0_i32_0 = arith.constant 0 : i32
    return %c0_i32, %arg0 : i32, i32
  }
  func.func @transform_1(%arg0: i32) -> (i32, i32) {
    %c0_i32 = arith.constant 0 : i32
    %c0_i32_0 = arith.constant 0 : i32
    return %arg0, %c0_i32 : i32, i32
  }
  func.func @transform_2(%arg0: i32) -> (i32, i32) {
    %c0_i32 = arith.constant 0 : i32
    %c0_i32_0 = arith.constant 0 : i32
    %c0_i32_1 = arith.constant 0 : i32
    return %c0_i32, %c0_i32_0 : i32, i32
  }
  func.func @transform_3(%arg0: i32) -> (i32, i32) {
    %c0_i32 = arith.constant 0 : i32
    %c0_i32_0 = arith.constant 0 : i32
    %c0_i32_1 = arith.constant 0 : i32
    return %c0_i32, %c0_i32_0 : i32, i32
  }
  func.func @transform_4(%arg0: i32) -> (i32, i32) {
    %c0_i32 = arith.constant 0 : i32
    %c0_i32_0 = arith.constant 0 : i32
    %c0_i32_1 = arith.constant 0 : i32
    return %c0_i32, %c0_i32_0 : i32, i32
  }
  func.func @transform_5(%arg0: i32) -> (i32, i32) {
    %c0_i32 = arith.constant 0 : i32
    %c0_i32_0 = arith.constant 0 : i32
    %c0_i32_1 = arith.constant 0 : i32
    return %c0_i32, %c0_i32_0 : i32, i32
  }
}

</mosaic_0001>

<llo_original>
// kernel: tpu_custom_call.1
$region0: #{tpu_custom_call.1}
  #allocation0 [shape = 'u32[]', space=smem, size = 0x4, offset = 0x4, fixed_abs, tag = 'smem constant byte address 0x4 - core index']
  #allocation1 [shape = 'u32[72,128]{1,0:T(1,128)}', space=vmem, size = 0x9000, scoped, tag = 'internal scratch']
  #allocation2 [shape = 'f32[8,256]{1,0:T(8,128)}', space=vmem, size = 0x2000, scoped, tag = 'scratch operand']
  %s0 = inlined_call_operand.hbm [shape: bf16[8,32], index: 0, kind: input, shape index: {}]
  %s1 = inlined_call_operand.hbm [shape: bf16[32,256], index: 1, kind: input, shape index: {}]
  %s2 = inlined_call_operand.hbm [shape: bf16[256,128], index: 2, kind: input, shape index: {}]
  %s3 = inlined_call_operand.hbm [shape: f32[3,256], index: 3, kind: input, shape index: {}]
  %s4 = inlined_call_operand.hbm [shape: f32[8,256], index: 4, kind: output, shape index: {0}]
  %s5 = inlined_call_operand.hbm [shape: f32[8,128], index: 5, kind: output, shape index: {1}]
  %6 = xla_tuple %s4, %s5
  %s7 = sld [smem:[#allocation0]]
  $region58: #{tpu_custom_call.1} parent=0
    _
  %s9 = ssub.s32 1, %s7
  %s10 = scalar_select 0, %s9, %s7
  $region1: #{tpu_custom_call.1} parent=0
    #allocation3 [shape = 'u8[2048]{0}', space=vmem, size = 0x800, scoped, tag = 'input window, operand 0, single buffered']
    #allocation4 [shape = 's32[1]{0}', space=sflag, size = 0x4, scoped, tag = 'scoped memory for tpu_custom_call.1']
    #allocation5 [shape = 's32[1]{0}', space=sflag, size = 0x4, scoped, tag = 'scoped memory for tpu_custom_call.1']
    #allocation6 [shape = 'u8[16384]{0}', space=vmem, size = 0x4000, scoped, tag = 'input window, operand 1, single buffered']
    #allocation7 [shape = 's32[1]{0}', space=sflag, size = 0x4, scoped, tag = 'scoped memory for tpu_custom_call.1']
    #allocation8 [shape = 'u8[65536]{0}', space=vmem, size = 0x10000, scoped, tag = 'input window, operand 2, single buffered']
    #allocation9 [shape = 'u8[4096]{0}', space=vmem, size = 0x1000, scoped, tag = 'input window, operand 3, single buffered']
    #allocation10 [shape = 's32[1]{0}', space=sflag, size = 0x4, scoped, tag = 'scoped memory for tpu_custom_call.1']
    #allocation11 [shape = 'u8[8192]{0}', space=vmem, size = 0x2000, scoped, tag = 'output window, operand 0, single buffered']
    #allocation12 [shape = 'u8[4096]{0}', space=vmem, size = 0x1000, scoped, tag = 'output window, operand 1, single buffered']
    #allocation13 [shape = 's32[1]{0}', space=sflag, size = 0x4, scoped, tag = 'scoped memory for tpu_custom_call.1']
    %11 = vsyncpa [#allocation4], 0
    %12 = vsyncpa [#allocation7], 0
    %13 = vsyncpa [#allocation10], 0
    %14 = vsyncpa [#allocation5], 0
    %15 = vsyncpa [#allocation13], 0
    // Predicated region
    $region2: #{tpu_custom_call.1} parent=1 // pred_check
      _
    $region3: #{tpu_custom_call.1} parent=1 // pred_check_branch
      %17 = sbr.rel (0) target = $region5
    $region4: #{tpu_custom_call.1} parent=1 // pred_region
      %19 = vsyncadd [#allocation4], 0
      %s21 = sshll.u32 %s0, 4
      %s22 = int_to_ptr.hbm [resolvable:$true] %s21
      %s23 = sshll.u32 [#allocation3], 4
      %s24 = int_to_ptr.vmem [resolvable:$true] %s23
      %26 = dma.hbm_to_vmem [thread:$0]  %s22, 64, %s24, [#allocation4]
    $region5: #{tpu_custom_call.1} parent=1 // pred_fallthru
      _
    // Predicated region
    $region6: #{tpu_custom_call.1} parent=1 // pred_check
      _
    $region7: #{tpu_custom_call.1} parent=1 // pred_check_branch
      %28 = sbr.rel (0) target = $region9
    $region8: #{tpu_custom_call.1} parent=1 // pred_region
      %30 = vsyncadd [#allocation7], 0
      %s31 = sshll.u32 %s1, 4
      %s32 = int_to_ptr.hbm [resolvable:$true] %s31
      %s33 = sshll.u32 [#allocation6], 4
      %s34 = int_to_ptr.vmem [resolvable:$true] %s33
      %39 = dma.hbm_to_vmem [thread:$0]  %s32, 512, %s34, [#allocation7], 128, 128, 8
    $region9: #{tpu_custom_call.1} parent=1 // pred_fallthru
      _
    // Predicated region
    $region10: #{tpu_custom_call.1} parent=1 // pred_check
      _
    $region11: #{tpu_custom_call.1} parent=1 // pred_check_branch
      %41 = sbr.rel (0) target = $region13
    $region12: #{tpu_custom_call.1} parent=1 // pred_region
      %43 = vsyncadd [#allocation7], 0
      %s44 = sshll.u32 %s2, 4
      %s45 = int_to_ptr.hbm [resolvable:$true] %s44
      %s46 = sshll.u32 [#allocation8], 4
      %s47 = int_to_ptr.vmem [resolvable:$true] %s46
      %52 = dma.hbm_to_vmem [thread:$0]  %s45, 2048, %s47, [#allocation7], 64, 64, 4
    $region13: #{tpu_custom_call.1} parent=1 // pred_fallthru
      _
    // Predicated region
    $region14: #{tpu_custom_call.1} parent=1 // pred_check
      _
    $region15: #{tpu_custom_call.1} parent=1 // pred_check_branch
      %54 = sbr.rel (0) target = $region17
    $region16: #{tpu_custom_call.1} parent=1 // pred_region
      %56 = vsyncadd [#allocation10], 0
      %s58 = sshll.u32 %s3, 4
      %s59 = int_to_ptr.hbm [resolvable:$true] %s58
      %s60 = sshll.u32 [#allocation9], 4
      %s61 = int_to_ptr.vmem [resolvable:$true] %s60
      %63 = dma.hbm_to_vmem [thread:$0]  %s59, 128, %s61, [#allocation10]
    $region17: #{tpu_custom_call.1} parent=1 // pred_fallthru
      _
    // Predicated region
    $region18: #{tpu_custom_call.1} parent=1 // pred_check
      _
    $region19: #{tpu_custom_call.1} parent=1 // pred_check_branch
      %65 = sbr.rel (0) target = $region21
    $region20: #{tpu_custom_call.1} parent=1 // pred_region
      %67 = dma.done [#allocation4], 64
    $region21: #{tpu_custom_call.1} parent=1 // pred_fallthru
      _
    // Predicated region
    $region22: #{tpu_custom_call.1} parent=1 // pred_check
      _
    $region23: #{tpu_custom_call.1} parent=1 // pred_check_branch
      %69 = sbr.rel (0) target = $region25
    $region24: #{tpu_custom_call.1} parent=1 // pred_region
      %71 = dma.done [#allocation7], 512
    $region25: #{tpu_custom_call.1} parent=1 // pred_fallthru
      _
    // Predicated region
    $region26: #{tpu_custom_call.1} parent=1 // pred_check
      _
    $region27: #{tpu_custom_call.1} parent=1 // pred_check_branch
      %73 = sbr.rel (0) target = $region29
    $region28: #{tpu_custom_call.1} parent=1 // pred_region
      %75 = dma.done [#allocation7], 2048
    $region29: #{tpu_custom_call.1} parent=1 // pred_fallthru
      _
    // Predicated region
    $region30: #{tpu_custom_call.1} parent=1 // pred_check
      _
    $region31: #{tpu_custom_call.1} parent=1 // pred_check_branch
      %77 = sbr.rel (0) target = $region33
    $region32: #{tpu_custom_call.1} parent=1 // pred_region
      %79 = dma.done [#allocation10], 128
    $region33: #{tpu_custom_call.1} parent=1 // pred_fallthru
      _
    %p81 = scmp.eq.s32.totalorder 0, 0
    // Predicated region
    $region34: #{tpu_custom_call.1} parent=1 // pred_check
      %p82 = pneg %p81
    $region35: #{tpu_custom_call.1} parent=1 // pred_check_branch
      %84 = sbr.rel (%p82) target = $region37
    $region36: #{tpu_custom_call.1} parent=1 // pred_region
      %85 = vst [vmem:[#allocation2] sm:$0xff] 0.0
      %86 = vst [vmem:[#allocation2 + $0x8] sm:$0xff] 0.0
    $region37: #{tpu_custom_call.1} parent=1 // pred_fallthru
      _
    %v87 = vld [vmem:[#allocation2] sm:$0xff]
    %v88 = vld [vmem:[#allocation2 + $0x8] sm:$0xff]
    %v89 = vld [vmem:[#allocation3] sm:$0xf]
    %v90 = vld [vmem:[#allocation6] sm:$0xff]
    %v91 = vld [vmem:[#allocation6 + $0x8] sm:$0xff]
    %v92 = vld [vmem:[#allocation6 + $0x10] sm:$0xff]
    %v93 = vld [vmem:[#allocation6 + $0x18] sm:$0xff]
    %v98 = vunpack.c.l.b16 %v90
    %v99 = vunpack.c.h.b16 %v90
    %v100 = vunpack.c.l.b16 %v91
    %v101 = vunpack.c.h.b16 %v91
    %v102 = vunpack.c.l.b16 %v92
    %v103 = vunpack.c.h.b16 %v92
    %v104 = vunpack.c.l.b16 %v93
    %v105 = vunpack.c.h.b16 %v93
    %v106 = vpack.c.b16 %v100, %v98
    %v107 = vpack.c.b16 %v101, %v99
    %v108 = vpack.c.b16 %v104, %v102
    %v109 = vpack.c.b16 %v105, %v103
    %vm114 = vcmask 261120
    %v116 = vsel %vm114, %v89, 0
    %118 = vmatpush.bf16.msra.mxu0 0
    %119 = vmatpush.bf16.msra.mxu0 0
    %120 = vmatpush.bf16.msra.mxu0 0
    %121 = vmatpush.bf16.msra.mxu0 0
    %122 = vmatpush.bf16.msra.mxu0 0
    %123 = vmatpush.bf16.msra.mxu0 0
    %124 = vmatpush.bf16.msra.mxu0 %v108
    %125 = vmatpush.bf16.msra.mxu0 %v106
    %126 = vmatmul.bf16.gmra.mxu0 %v116
    %v127 = vpop.f32.mrf.mxu0
    %v128 = vadd.f32 0.0, %v127
    %v129 = vpop.f32.mrf.mxu0
    %130 = vdwg.mxu0
    %131 = vmatpush.bf16.msra.mxu0 0
    %132 = vmatpush.bf16.msra.mxu0 0
    %133 = vmatpush.bf16.msra.mxu0 0
    %134 = vmatpush.bf16.msra.mxu0 0
    %135 = vmatpush.bf16.msra.mxu0 0
    %136 = vmatpush.bf16.msra.mxu0 0
    %137 = vmatpush.bf16.msra.mxu0 %v109
    %138 = vmatpush.bf16.msra.mxu0 %v107
    %139 = vmatmul.bf16.gmra.mxu0 %v116
    %v140 = vpop.f32.mrf.mxu0
    %v141 = vadd.f32 0.0, %v140
    %v142 = vpop.f32.mrf.mxu0
    %143 = vdwg.mxu0
    %v144 = vadd.f32 %v87, %v128
    %v145 = vadd.f32 %v88, %v141
    %146 = vst [vmem:[#allocation2] sm:$0xff] %v144
    %147 = vst [vmem:[#allocation2 + $0x8] sm:$0xff] %v145
    // Predicated region
    $region38: #{tpu_custom_call.1} parent=1 // pred_check
      %p148 = pneg %p81
    $region39: #{tpu_custom_call.1} parent=1 // pred_check_branch
      %150 = sbr.rel (%p148) target = $region41
    $region40: #{tpu_custom_call.1} parent=1 // pred_region
      %v151 = vld [vmem:[#allocation2] sm:$0xff]
      %v152 = vld [vmem:[#allocation2 + $0x8] sm:$0xff]
      %v153 = vrot.slane %v151, 4
      %v154 = vadd.f32 %v151, %v153
      %v155 = vrot.slane %v154, 2
      %v156 = vadd.f32 %v154, %v155
      %v157 = vrot.slane %v156, 1
      %v158 = vadd.f32 %v156, %v157
      %v159 = vrot.slane %v152, 4
      %v160 = vadd.f32 %v152, %v159
      %v161 = vrot.slane %v160, 2
      %v162 = vadd.f32 %v160, %v161
      %v163 = vrot.slane %v162, 1
      %v164 = vadd.f32 %v162, %v163
      %v165 = vmul.f32 %v158, 0.125
      %v166 = vmul.f32 %v164, 0.125
      %v167 = vmul.f32 %v151, %v151
      %v168 = vmul.f32 %v152, %v152
      %v169 = vrot.slane %v167, 4
      %v170 = vadd.f32 %v167, %v169
      %v171 = vrot.slane %v170, 2
      %v172 = vadd.f32 %v170, %v171
      %v173 = vrot.slane %v172, 1
      %v174 = vadd.f32 %v172, %v173
      %v175 = vrot.slane %v168, 4
      %v176 = vadd.f32 %v168, %v175
      %v177 = vrot.slane %v176, 2
      %v178 = vadd.f32 %v176, %v177
      %v179 = vrot.slane %v178, 1
      %v180 = vadd.f32 %v178, %v179
      %v181 = vmul.f32 %v174, 0.125
      %v182 = vmul.f32 %v180, 0.125
      %v183 = vmul.f32 %v165, %v165
      %v184 = vmul.f32 %v166, %v166
      %v185 = vsub.f32 %v181, %v183
      %v186 = vsub.f32 %v182, %v184
      %v187 = vld [vmem:[#allocation9] sm:$0x77]
      %v188 = vadd.f32 %v185, 1e-05
      %v189 = vadd.f32 %v186, 1e-05
      %v190 = vrsqrt.pop %v188
      %v191 = vmul.f32 %v190, %v188
      %v192 = vmul.f32 %v191, %v190
      %v193 = vmul.f32 0.5, %v192
      %v194 = vsub.f32 1.5, %v193
      %v195 = vmul.f32 %v190, %v194
      %vm196 = vweird.f32 %v188
      %vm197 = vweird.f32 %v190
      %vm198 = vmor %vm196, %vm197
      %v199 = vsel %vm198, %v190, %v195
      %v200 = vrsqrt.pop %v189
      %v201 = vmul.f32 %v200, %v189
      %v202 = vmul.f32 %v201, %v200
      %v203 = vmul.f32 0.5, %v202
      %v204 = vsub.f32 1.5, %v203
      %v205 = vmul.f32 %v200, %v204
      %vm206 = vweird.f32 %v189
      %vm207 = vweird.f32 %v200
      %vm208 = vmor %vm206, %vm207
      %v209 = vsel %vm208, %v200, %v205
      %v212 = vrot.slane %v209, 4
      %vm213 = vcmask 1043456
      %v214 = vsel %vm213, %v199, %v212
      %v216 = vmul.f32 %v187, %v214
      %v218 = vperm.slane %v216, 0
      %v219 = vperm.slane %v216, 4
      %v222 = vmul.f32 %v165, %v218
      %v223 = vmul.f32 %v166, %v219
      %v226 = vrot.slane %v223, 4
      %v227 = vsel %vm213, %v222, %v226
      %v228 = vrot.slane %v227, 7
      %v230 = vsub.f32 %v187, %v228
      %v231 = vperm.slane %v218, 0
      %v232 = vperm.slane %v219, 0
      %v233 = vmul.f32 %v151, %v231
      %v234 = vmul.f32 %v152, %v232
      %v236 = vperm.slane %v230, 1
      %v237 = vperm.slane %v230, 5
      %v240 = vperm.slane %v236, 1
      %v241 = vperm.slane %v237, 1
      %v242 = vadd.f32 %v233, %v240
      %v243 = vadd.f32 %v234, %v241
      %244 = vst [vmem:[#allocation11] sm:$0xff] %v242
      %245 = vst [vmem:[#allocation11 + $0x8] sm:$0xff] %v243
      %v246 = vpack.c.bf16 %v242, %v242
      %v247 = vpack.c.bf16 %v243, %v243
      %v248 = vld [vmem:[#allocation8] sm:$0xf]
      %v249 = vld [vmem:[#allocation8 + $0x4] sm:$0xf]
      %v250 = vld [vmem:[#allocation8 + $0x8] sm:$0xf]
      %v251 = vld [vmem:[#allocation8 + $0xc] sm:$0xf]
      %v252 = vld [vmem:[#allocation8 + $0x10] sm:$0xf]
      %v253 = vld [vmem:[#allocation8 + $0x14] sm:$0xf]
      %v254 = vld [vmem:[#allocation8 + $0x18] sm:$0xf]
      %v255 = vld [vmem:[#allocation8 + $0x1c] sm:$0xf]
      %v256 = vld [vmem:[#allocation8 + $0x20] sm:$0xf]
      %v257 = vld [vmem:[#allocation8 + $0x24] sm:$0xf]
      %v258 = vld [vmem:[#allocation8 + $0x28] sm:$0xf]
      %v259 = vld [vmem:[#allocation8 + $0x2c] sm:$0xf]
      %v260 = vld [vmem:[#allocation8 + $0x30] sm:$0xf]
      %v261 = vld [vmem:[#allocation8 + $0x34] sm:$0xf]
      %v262 = vld [vmem:[#allocation8 + $0x38] sm:$0xf]
      %v263 = vld [vmem:[#allocation8 + $0x3c] sm:$0xf]
      %v264 = vld [vmem:[#allocation8 + $0x40] sm:$0xf]
      %v265 = vld [vmem:[#allocation8 + $0x44] sm:$0xf]
      %v266 = vld [vmem:[#allocation8 + $0x48] sm:$0xf]
      %v267 = vld [vmem:[#allocation8 + $0x4c] sm:$0xf]
      %v268 = vld [vmem:[#allocation8 + $0x50] sm:$0xf]
      %v269 = vld [vmem:[#allocation8 + $0x54] sm:$0xf]
      %v270 = vld [vmem:[#allocation8 + $0x58] sm:$0xf]
      %v271 = vld [vmem:[#allocation8 + $0x5c] sm:$0xf]
      %v272 = vld [vmem:[#allocation8 + $0x60] sm:$0xf]
      %v273 = vld [vmem:[#allocation8 + $0x64] sm:$0xf]
      %v274 = vld [vmem:[#allocation8 + $0x68] sm:$0xf]
      %v275 = vld [vmem:[#allocation8 + $0x6c] sm:$0xf]
      %v276 = vld [vmem:[#allocation8 + $0x70] sm:$0xf]
      %v277 = vld [vmem:[#allocation8 + $0x74] sm:$0xf]
      %v278 = vld [vmem:[#allocation8 + $0x78] sm:$0xf]
      %v279 = vld [vmem:[#allocation8 + $0x7c] sm:$0xf]
      %v280 = vperm.slane %v187, 2
      %v313 = vunpack.c.l.b16 %v248
      %v314 = vunpack.c.l.b16 %v249
      %v315 = vunpack.c.l.b16 %v250
      %v316 = vunpack.c.l.b16 %v251
      %v317 = vunpack.c.l.b16 %v252
      %v318 = vunpack.c.l.b16 %v253
      %v319 = vunpack.c.l.b16 %v254
      %v320 = vunpack.c.l.b16 %v255
      %v321 = vunpack.c.l.b16 %v256
      %v322 = vunpack.c.l.b16 %v257
      %v323 = vunpack.c.l.b16 %v258
      %v324 = vunpack.c.l.b16 %v259
      %v325 = vunpack.c.l.b16 %v260
      %v326 = vunpack.c.l.b16 %v261
      %v327 = vunpack.c.l.b16 %v262
      %v328 = vunpack.c.l.b16 %v263
      %v329 = vunpack.c.l.b16 %v264
      %v330 = vunpack.c.l.b16 %v265
      %v331 = vunpack.c.l.b16 %v266
      %v332 = vunpack.c.l.b16 %v267
      %v333 = vunpack.c.l.b16 %v268
      %v334 = vunpack.c.l.b16 %v269
      %v335 = vunpack.c.l.b16 %v270
      %v336 = vunpack.c.l.b16 %v271
      %v337 = vunpack.c.l.b16 %v272
      %v338 = vunpack.c.l.b16 %v273
      %v339 = vunpack.c.l.b16 %v274
      %v340 = vunpack.c.l.b16 %v275
      %v341 = vunpack.c.l.b16 %v276
      %v342 = vunpack.c.l.b16 %v277
      %v343 = vunpack.c.l.b16 %v278
      %v344 = vunpack.c.l.b16 %v279
      %v345 = vpack.c.b16 %v314, %v313
      %v346 = vpack.c.b16 %v316, %v315
      %v347 = vpack.c.b16 %v318, %v317
      %v348 = vpack.c.b16 %v320, %v319
      %v349 = vpack.c.b16 %v322, %v321
      %v350 = vpack.c.b16 %v324, %v323
      %v351 = vpack.c.b16 %v326, %v325
      %v352 = vpack.c.b16 %v328, %v327
      %v353 = vpack.c.b16 %v330, %v329
      %v354 = vpack.c.b16 %v332, %v331
      %v355 = vpack.c.b16 %v334, %v333
      %v356 = vpack.c.b16 %v336, %v335
      %v357 = vpack.c.b16 %v338, %v337
      %v358 = vpack.c.b16 %v340, %v339
      %v359 = vpack.c.b16 %v342, %v341
      %v360 = vpack.c.b16 %v344, %v343
      %377 = vmatpush.bf16.msra.mxu0 %v352
      %378 = vmatpush.bf16.msra.mxu0 %v351
      %379 = vmatpush.bf16.msra.mxu0 %v350
      %380 = vmatpush.bf16.msra.mxu0 %v349
      %381 = vmatpush.bf16.msra.mxu0 %v348
      %382 = vmatpush.bf16.msra.mxu0 %v347
      %383 = vmatpush.bf16.msra.mxu0 %v346
      %384 = vmatpush.bf16.msra.mxu0 %v345
      %385 = vmatmul.bf16.gmra.mxu0 %v246
      %v386 = vpop.f32.mrf.mxu0
      %v387 = vadd.f32 %v280, %v386
      %v388 = vpop.f32.mrf.mxu0
      %389 = vdwg.mxu0
      %390 = vmatpush.bf16.msra.mxu0 %v360
      %391 = vmatpush.bf16.msra.mxu0 %v359
      %392 = vmatpush.bf16.msra.mxu0 %v358
      %393 = vmatpush.bf16.msra.mxu0 %v357
      %394 = vmatpush.bf16.msra.mxu0 %v356
      %395 = vmatpush.bf16.msra.mxu0 %v355
      %396 = vmatpush.bf16.msra.mxu0 %v354
      %397 = vmatpush.bf16.msra.mxu0 %v353
      %398 = vmatmul.bf16.gmra.mxu0 %v247
      %v399 = vpop.f32.mrf.mxu0
      %v400 = vadd.f32 %v387, %v399
      %v401 = vpop.f32.mrf.mxu0
      %402 = vdwg.mxu0
      %403 = vst [vmem:[#allocation12] sm:$0xff] %v400
    $region41: #{tpu_custom_call.1} parent=1 // pred_fallthru
      _
    // Predicated region
    $region42: #{tpu_custom_call.1} parent=1 // pred_check
      _
    $region43: #{tpu_custom_call.1} parent=1 // pred_check_branch
      %405 = sbr.rel (0) target = $region45
    $region44: #{tpu_custom_call.1} parent=1 // pred_region
      %407 = vsyncadd [#allocation5], 0
      %s409 = sshll.u32 [#allocation11], 4
      %s410 = int_to_ptr.vmem [resolvable:$true] %s409
      %s411 = sshll.u32 %s4, 4
      %s412 = int_to_ptr.hbm [resolvable:$true] %s411
      %414 = dma.vmem_to_hbm [thread:$0]  %s410, 256, %s412, [#allocation5]
    $region45: #{tpu_custom_call.1} parent=1 // pred_fallthru
      _
    // Predicated region
    $region46: #{tpu_custom_call.1} parent=1 // pred_check
      _
    $region47: #{tpu_custom_call.1} parent=1 // pred_check_branch
      %416 = sbr.rel (0) target = $region49
    $region48: #{tpu_custom_call.1} parent=1 // pred_region
      %418 = vsyncadd [#allocation13], 0
      %s420 = sshll.u32 [#allocation12], 4
      %s421 = int_to_ptr.vmem [resolvable:$true] %s420
      %s422 = sshll.u32 %s5, 4
      %s423 = int_to_ptr.hbm [resolvable:$true] %s422
      %425 = dma.vmem_to_hbm [thread:$0]  %s421, 128, %s423, [#allocation13]
    $region49: #{tpu_custom_call.1} parent=1 // pred_fallthru
      _
    // Predicated region
    $region50: #{tpu_custom_call.1} parent=1 // pred_check
      _
    $region51: #{tpu_custom_call.1} parent=1 // pred_check_branch
      %427 = sbr.rel (0) target = $region53
    $region52: #{tpu_custom_call.1} parent=1 // pred_region
      %429 = dma.done [#allocation5], 256
    $region53: #{tpu_custom_call.1} parent=1 // pred_fallthru
      _
    // Predicated region
    $region54: #{tpu_custom_call.1} parent=1 // pred_check
      _
    $region55: #{tpu_custom_call.1} parent=1 // pred_check_branch
      %431 = sbr.rel (0) target = $region57
    $region56: #{tpu_custom_call.1} parent=1 // pred_region
      %433 = dma.done [#allocation13], 128
    $region57: #{tpu_custom_call.1} parent=1 // pred_fallthru
      _
    %434 = vsyncpa [#allocation4], 1
    %435 = vsyncpa [#allocation7], 1
    %436 = vsyncpa [#allocation10], 1
    %437 = vsyncpa [#allocation5], 1
    %438 = vsyncpa [#allocation13], 1

</llo_original>
